<compile_context>
chip_gen: v6e
topology: v6e:2x2x1
jax: 0.10.0
libtpu: 0.0.40
codegen_flags: <defaults>
</compile_context>

<pallas_src>
import functools

import jax
import jax.numpy as jnp
from jax.experimental import pallas as pl
from jax.experimental.pallas import tpu as pltpu


def _round_up(x: int, m: int) -> int:
    return ((x + m - 1) // m) * m


def _fnn_fused_kernel(x_ref, *refs, n_hidden: int):
    """Fused MLP body.

    refs = (w0, b0, ..., w_{n_hidden-1}, b_{n_hidden-1}, w_lastT, b_last, o_ref)
      w_i      : bf16 (in_i, out_i)   -- resident VMEM, MXU matmul operand
      b_i      : f32  (1, out_i)      -- broadcast bias (f32 epilogue)
      w_lastT  : f32  (1, H_last)     -- final layer weight, transposed, full f32
      b_last   : f32  (1, 1)
      o_ref    : f32  (1, 1, tb)      -- lane-dense output row for this tile
    """
    o_ref = refs[-1]
    wb = refs[:-1]

    # x arrives as f32 (single HBM pass); cast to bf16 on the VPU for the MXU.
    h = x_ref[...].astype(jnp.bfloat16)          # bf16 (tb, in)
    h_f32 = None
    for i in range(n_hidden):                    # statically unrolled
        w = wb[2 * i][...]                       # bf16 (in_i, out_i)
        b = wb[2 * i + 1][...]                   # f32  (1, out_i) -> broadcast
        h_f32 = jnp.dot(h, w, preferred_element_type=jnp.float32) + b
        h_f32 = jnp.maximum(h_f32, 0.0)          # ReLU, f32 epilogue (v5e-safe)
        h = h_f32.astype(jnp.bfloat16)           # feed next MXU matmul in bf16

    # Final Linear(H_last -> 1) in full f32: contract (1,H) with (tb,H) on the
    # last dims -> (1, tb).  This yields the result directly as a lane-dense
    # row (no (tb,1) column + relayout, no masked one-lane stores).
    w_last = wb[2 * n_hidden][...]               # f32 (1, H_last)
    b_last = wb[2 * n_hidden + 1][...]           # f32 (1, 1)
    y = jax.lax.dot_general(
        w_last, h_f32, (((1,), (1,)), ((), ())),
        preferred_element_type=jnp.float32) + b_last      # (1, tb)
    o_ref[...] = y.reshape(o_ref.shape)          # (1, 1, tb) lane-dense store


def fnn_forward(x, params, *, batch_tile: int = 1024):
    """Fused forward pass identical to the PyTorch nn.Sequential:
    [Linear, ReLU] * len(hidden_sizes), then Linear(..., 1) with NO final ReLU.

    x: (batch, input_size) f32.  params: list of (w, b), w is (in, out) f32.
    """
    n_layers = len(params)
    assert n_layers >= 2, "FNN requires at least one hidden layer + final Linear"
    n_hidden = n_layers - 1

    batch, in_dim = x.shape

    # Pad batch only up to a sublane multiple (8) when needed (no full-tile pad).
    padded = _round_up(batch, 8)
    if padded != batch:
        x = jnp.pad(x, ((0, padded - batch), (0, 0)))

    widths = [in_dim] + [w.shape[1] for (w, _) in params]
    max_width = max(widths)

    # Weights/biases: whole-array resident VMEM operands (single copy, no
    # per-tile DMA, no double-buffering).  Hidden weights bf16 for the MXU;
    # final-layer weight stays f32 (it is only used in the f32 contraction).
    flat_params = []
    wb_specs = []
    for li, (w, b) in enumerate(params):
        if li < n_hidden:
            w_in = w.astype(jnp.bfloat16)                 # (in, out)
        else:
            w_in = jnp.transpose(w).astype(jnp.float32)   # (1, H_last), f32
        b_in = b.reshape(1, -1).astype(jnp.float32)
        flat_params += [w_in, b_in]
        wb_specs += [pl.BlockSpec(memory_space=pltpu.MemorySpace.VMEM),
                     pl.BlockSpec(memory_space=pltpu.MemorySpace.VMEM)]

    weight_bytes = sum(int(a.size) * a.dtype.itemsize for a in flat_params)

    def tile_bytes(t):
        return (2 * t * in_dim * 4      # double-buffered x tile (f32)
                + 2 * t * 4             # double-buffered out tile (f32 row)
                + 6 * t * max_width)    # activation temporaries (f32 + bf16)

    # Batch tile: aim for >=2 grid tiles (v7x megacore), multiple of 8,
    # prefer a multiple of 128 (full MXU rows / lane-dense out block),
    # shrink if the VMEM estimate gets large for very wide hidden layers.
    half = -(-padded // 2)
    tb = max(8, min(batch_tile, _round_up(half, 8), padded))
    if tb >= 128:
        tb = (tb // 128) * 128
    while tb > 128 and weight_bytes + tile_bytes(tb) > 40 * (1 << 20):
        tb = max(128, ((tb // 2) // 128) * 128)

    n_tiles = pl.cdiv(padded, tb)
    grid = (n_tiles,)

    vmem_limit = int(min(64 * (1 << 20),
                         max(32 * (1 << 20), 2 * (weight_bytes + tile_bytes(tb)))))

    kernel = functools.partial(_fnn_fused_kernel, n_hidden=n_hidden)
    out = pl.pallas_call(
        kernel,
        out_shape=jax.ShapeDtypeStruct((n_tiles, 1, tb), jnp.float32),
        grid=grid,
        in_specs=[pl.BlockSpec((tb, in_dim), lambda i: (i, 0))] + wb_specs,
        out_specs=pl.BlockSpec((1, 1, tb), lambda i: (i, 0, 0)),
        compiler_params=pltpu.CompilerParams(
            # Batch tiles are independent -> shard across v7x's 2 TensorCores.
            dimension_semantics=("parallel",),
            vmem_limit_bytes=vmem_limit,
        ),
    )(x, *flat_params)

    # Lane-dense (n_tiles, 1, tb) -> (batch, 1); rows past `batch` are garbage
    # from the ragged last tile and are sliced off (rows are independent).
    return out.reshape(-1)[:batch].reshape(batch, 1)


def init_fnn_params(key, input_size, hidden_sizes):
    """Deterministic init mimicking PyTorch nn.Linear default:
    U(-1/sqrt(fan_in), 1/sqrt(fan_in)) for both weight and bias."""
    dims = [input_size] + list(hidden_sizes) + [1]
    params = []
    for i in range(len(dims) - 1):
        fan_in, fan_out = dims[i], dims[i + 1]
        key, kw, kb = jax.random.split(key, 3)
        bound = 1.0 / jnp.sqrt(jnp.float32(fan_in))
        w = jax.random.uniform(kw, (fan_in, fan_out), jnp.float32, -bound, bound)
        b = jax.random.uniform(kb, (1, fan_out), jnp.float32, -bound, bound)
        params.append((w, b))
    return params


def fnn_forward_ref(x, params):
    """Plain-JAX reference mirroring the kernel numerics (bf16 hidden matmuls
    with f32 accumulation/epilogue, final Linear in full f32)."""
    h = x.astype(jnp.bfloat16)
    h_f32 = None
    for (w, b) in params[:-1]:
        h_f32 = jnp.dot(h, w.astype(jnp.bfloat16),
                        preferred_element_type=jnp.float32) + b.reshape(1, -1)
        h_f32 = jnp.maximum(h_f32, 0.0)
        h = h_f32.astype(jnp.bfloat16)
    w, b = params[-1]
    return jnp.dot(h_f32, w.astype(jnp.float32)) + b.reshape(1, -1)


if __name__ == "__main__":
    key = jax.random.PRNGKey(0)

    # Small shapes consistent with the module: x (batch, input_size).
    batch = 8
    input_size = 16
    hidden_sizes = [32, 32]

    key, kx, kp = jax.random.split(key, 3)
    x = jax.random.normal(kx, (batch, input_size), jnp.float32)
    params = init_fnn_params(kp, input_size, hidden_sizes)

    fwd = jax.jit(fnn_forward)
    out = jax.block_until_ready(fwd(x, params))
    ref = fnn_forward_ref(x, params)
    assert out.shape == (batch, 1), out.shape
    assert jnp.allclose(out, ref, atol=5e-3, rtol=5e-3), "mismatch vs reference"

    # Second check: multi-tile grid + ragged last tile (no full-tile padding).
    batch2 = 200
    key, kx2 = jax.random.split(key)
    x2 = jax.random.normal(kx2, (batch2, input_size), jnp.float32)
    out2 = jax.block_until_ready(jax.jit(fnn_forward)(x2, params))
    ref2 = fnn_forward_ref(x2, params)
    assert out2.shape == (batch2, 1), out2.shape
    assert jnp.allclose(out2, ref2, atol=5e-3, rtol=5e-3), "mismatch vs reference (ragged)"

    print("KERNEL_OK")
</pallas_src>

<mosaic_0001>
module attributes {stable_mosaic.version = 11 : i64} {
  func.func @_fnn_fused_kernel(%arg0: i32, %arg1: memref<8x16xf32, #tpu.memory_space<vmem>>, %arg2: memref<16x32xbf16, #tpu.memory_space<vmem>>, %arg3: memref<1x32xf32, #tpu.memory_space<vmem>>, %arg4: memref<32x32xbf16, #tpu.memory_space<vmem>>, %arg5: memref<1x32xf32, #tpu.memory_space<vmem>>, %arg6: memref<1x32xf32, #tpu.memory_space<vmem>>, %arg7: memref<1x1xf32, #tpu.memory_space<vmem>>, %arg8: memref<1x1x8xf32, #tpu.memory_space<vmem>>) attributes {dimension_semantics = [#tpu.dimension_semantics<parallel>], iteration_bounds = array<i64: 1>, scalar_prefetch = 0 : i64, scratch_operands = 0 : i64, tpu.core_type = #tpu.core_type<tc>, window_params = [{transform_indices = @transform_0, window_bounds = array<i64: 8, 16>}, {pipeline_mode = #tpu.pipeline_mode<synchronous>, transform_indices = @transform_1, window_bounds = array<i64: 16, 32>}, {pipeline_mode = #tpu.pipeline_mode<synchronous>, transform_indices = @transform_2, window_bounds = array<i64: 1, 32>}, {pipeline_mode = #tpu.pipeline_mode<synchronous>, transform_indices = @transform_3, window_bounds = array<i64: 32, 32>}, {pipeline_mode = #tpu.pipeline_mode<synchronous>, transform_indices = @transform_4, window_bounds = array<i64: 1, 32>}, {pipeline_mode = #tpu.pipeline_mode<synchronous>, transform_indices = @transform_5, window_bounds = array<i64: 1, 32>}, {pipeline_mode = #tpu.pipeline_mode<synchronous>, transform_indices = @transform_6, window_bounds = array<i64: 1, 1>}, {transform_indices = @transform_7, window_bounds = array<i64: 1, 1, 8>}]} {
    %c0 = arith.constant 0 : index
    %c0_0 = arith.constant 0 : index
    %0 = vector.load %arg1[%c0, %c0_0] : memref<8x16xf32, #tpu.memory_space<vmem>>, vector<8x16xf32>
    %1 = arith.truncf %0 : vector<8x16xf32> to vector<8x16xbf16>
    %c0_1 = arith.constant 0 : index
    %c0_2 = arith.constant 0 : index
    %2 = vector.load %arg2[%c0_1, %c0_2] : memref<16x32xbf16, #tpu.memory_space<vmem>>, vector<16x32xbf16>
    %c0_3 = arith.constant 0 : index
    %c0_4 = arith.constant 0 : index
    %3 = vector.load %arg3[%c0_3, %c0_4] : memref<1x32xf32, #tpu.memory_space<vmem>>, vector<1x32xf32>
    %cst = arith.constant dense<0.000000e+00> : vector<8x32xf32>
    %4 = tpu.matmul %1, %2, %cst {dimension_numbers = #tpu.dot_dimension_numbers<[1], [0], [0], [1], [0, 0, 1, 1], [], []>} : vector<8x16xbf16>, vector<16x32xbf16>, vector<8x32xf32> -> vector<8x32xf32>
    %5 = vector.broadcast %3 : vector<1x32xf32> to vector<8x32xf32>
    %6 = arith.addf %4, %5 : vector<8x32xf32>
    %cst_5 = arith.constant 0.000000e+00 : f32
    %7 = vector.broadcast %cst_5 : f32 to vector<8x32xf32>
    %8 = arith.maximumf %6, %7 : vector<8x32xf32>
    %9 = arith.truncf %8 : vector<8x32xf32> to vector<8x32xbf16>
    %c0_6 = arith.constant 0 : index
    %c0_7 = arith.constant 0 : index
    %10 = vector.load %arg4[%c0_6, %c0_7] : memref<32x32xbf16, #tpu.memory_space<vmem>>, vector<32x32xbf16>
    %c0_8 = arith.constant 0 : index
    %c0_9 = arith.constant 0 : index
    %11 = vector.load %arg5[%c0_8, %c0_9] : memref<1x32xf32, #tpu.memory_space<vmem>>, vector<1x32xf32>
    %cst_10 = arith.constant dense<0.000000e+00> : vector<8x32xf32>
    %12 = tpu.matmul %9, %10, %cst_10 {dimension_numbers = #tpu.dot_dimension_numbers<[1], [0], [0], [1], [0, 0, 1, 1], [], []>} : vector<8x32xbf16>, vector<32x32xbf16>, vector<8x32xf32> -> vector<8x32xf32>
    %13 = vector.broadcast %11 : vector<1x32xf32> to vector<8x32xf32>
    %14 = arith.addf %12, %13 : vector<8x32xf32>
    %cst_11 = arith.constant 0.000000e+00 : f32
    %15 = vector.broadcast %cst_11 : f32 to vector<8x32xf32>
    %16 = arith.maximumf %14, %15 : vector<8x32xf32>
    %c0_12 = arith.constant 0 : index
    %c0_13 = arith.constant 0 : index
    %17 = vector.load %arg6[%c0_12, %c0_13] : memref<1x32xf32, #tpu.memory_space<vmem>>, vector<1x32xf32>
    %c0_14 = arith.constant 0 : index
    %c0_15 = arith.constant 0 : index
    %18 = vector.load %arg7[%c0_14, %c0_15] : memref<1x1xf32, #tpu.memory_space<vmem>>, vector<1x1xf32>
    %cst_16 = arith.constant dense<0.000000e+00> : vector<1x8xf32>
    %19 = tpu.matmul %17, %16, %cst_16 {dimension_numbers = #tpu.dot_dimension_numbers<[1], [1], [0], [0], [0, 0, 1, 0], [], []>} : vector<1x32xf32>, vector<8x32xf32>, vector<1x8xf32> -> vector<1x8xf32>
    %20 = vector.broadcast %18 : vector<1x1xf32> to vector<1x8xf32>
    %21 = arith.addf %19, %20 : vector<1x8xf32>
    %22 = vector.shape_cast %21 : vector<1x8xf32> to vector<1x1x8xf32>
    %c0_17 = arith.constant 0 : index
    %c0_18 = arith.constant 0 : index
    %c0_19 = arith.constant 0 : index
    %23 = vector.load %arg8[%c0_17, %c0_18, %c0_19] : memref<1x1x8xf32, #tpu.memory_space<vmem>>, vector<1x1x8xf32>
    tpu.vector_store %arg8[%c0_17, %c0_18, %c0_19], %22 {strides = array<i32>} : memref<1x1x8xf32, #tpu.memory_space<vmem>>, vector<1x1x8xf32>,
    return
  }
  func.func @transform_0(%arg0: i32) -> (i32, i32) {
    %c0_i32 = arith.constant 0 : i32
    %c0_i32_0 = arith.constant 0 : i32
    return %arg0, %c0_i32 : i32, i32
  }
  func.func @transform_1(%arg0: i32) -> (i32, i32) {
    %c0_i32 = arith.constant 0 : i32
    %c0_i32_0 = arith.constant 0 : i32
    %c0_i32_1 = arith.constant 0 : i32
    return %c0_i32, %c0_i32_0 : i32, i32
  }
  func.func @transform_2(%arg0: i32) -> (i32, i32) {
    %c0_i32 = arith.constant 0 : i32
    %c0_i32_0 = arith.constant 0 : i32
    %c0_i32_1 = arith.constant 0 : i32
    return %c0_i32, %c0_i32_0 : i32, i32
  }
  func.func @transform_3(%arg0: i32) -> (i32, i32) {
    %c0_i32 = arith.constant 0 : i32
    %c0_i32_0 = arith.constant 0 : i32
    %c0_i32_1 = arith.constant 0 : i32
    return %c0_i32, %c0_i32_0 : i32, i32
  }
  func.func @transform_4(%arg0: i32) -> (i32, i32) {
    %c0_i32 = arith.constant 0 : i32
    %c0_i32_0 = arith.constant 0 : i32
    %c0_i32_1 = arith.constant 0 : i32
    return %c0_i32, %c0_i32_0 : i32, i32
  }
  func.func @transform_5(%arg0: i32) -> (i32, i32) {
    %c0_i32 = arith.constant 0 : i32
    %c0_i32_0 = arith.constant 0 : i32
    %c0_i32_1 = arith.constant 0 : i32
    return %c0_i32, %c0_i32_0 : i32, i32
  }
  func.func @transform_6(%arg0: i32) -> (i32, i32) {
    %c0_i32 = arith.constant 0 : i32
    %c0_i32_0 = arith.constant 0 : i32
    %c0_i32_1 = arith.constant 0 : i32
    return %c0_i32, %c0_i32_0 : i32, i32
  }
  func.func @transform_7(%arg0: i32) -> (i32, i32, i32) {
    %c0_i32 = arith.constant 0 : i32
    %c0_i32_0 = arith.constant 0 : i32
    %c0_i32_1 = arith.constant 0 : i32
    return %arg0, %c0_i32, %c0_i32_0 : i32, i32, i32
  }
}

</mosaic_0001>

<llo_original>
// kernel: fnn_forward.1
$region0: #{fnn_forward.1}
  #allocation0 [shape = 'u32[]', space=smem, size = 0x4, offset = 0x4, fixed_abs, tag = 'smem constant byte address 0x4 - core index']
  #allocation1 [shape = 'u32[144,128]{1,0:T(1,128)}', space=vmem, size = 0x12000, scoped, tag = 'internal scratch']
  #allocation2 [shape = 'f32[1,1]{1,0:T(1,128)S(1)}', space=vmem, size = 0x200, scoped, tag = 'scoped memory for fnn_forward.1']
  %s0 = inlined_call_operand.vmem [shape: f32[8,16], index: 0, kind: input, shape index: {}]
  %s1 = inlined_call_operand.vmem [shape: bf16[16,32], index: 1, kind: input, shape index: {}]
  %s2 = inlined_call_operand.vmem [shape: f32[1,32], index: 2, kind: input, shape index: {}]
  %s3 = inlined_call_operand.vmem [shape: bf16[32,32], index: 3, kind: input, shape index: {}]
  %s4 = inlined_call_operand.vmem [shape: f32[1,32], index: 4, kind: input, shape index: {}]
  %s5 = inlined_call_operand.vmem [shape: f32[1,32], index: 5, kind: input, shape index: {}]
  %s6 = inlined_call_operand.<no memory space> [shape: f32[1,1], index: 6, kind: input, shape index: {}]
  %s7 = inlined_call_operand.hbm [shape: f32[1,1,8], index: 7, kind: output, shape index: {}]
  %s8 = sld [smem:[#allocation0]]
  $region38: #{fnn_forward.1} parent=0
    _
  %s10 = ssub.s32 1, %s8
  %s11 = scalar_select 0, %s10, %s8
  %v12 = vstv %s6
  %13 = vst [vmem:[#allocation2] sm:$0x1] %v12
  $region1: #{fnn_forward.1} parent=0
    #allocation3 [shape = 'u8[512]{0}', space=vmem, size = 0x400, scoped, tag = 'output window, operand 0, single buffered']
    #allocation4 [shape = 's32[1]{0}', space=sflag, size = 0x4, scoped, tag = 'scoped memory for fnn_forward.1']
    %14 = vsyncpa [#allocation4], 0
    // Predicated region
    $region2: #{fnn_forward.1} parent=1 // pred_check
      _
    $region3: #{fnn_forward.1} parent=1 // pred_check_branch
      %16 = sbr.rel (0) target = $region5
    $region4: #{fnn_forward.1} parent=1 // pred_region
      _
    $region5: #{fnn_forward.1} parent=1 // pred_fallthru
      _
    // Predicated region
    $region6: #{fnn_forward.1} parent=1 // pred_check
      _
    $region7: #{fnn_forward.1} parent=1 // pred_check_branch
      %18 = sbr.rel (0) target = $region9
    $region8: #{fnn_forward.1} parent=1 // pred_region
      _
    $region9: #{fnn_forward.1} parent=1 // pred_fallthru
      _
    // Predicated region
    $region10: #{fnn_forward.1} parent=1 // pred_check
      _
    $region11: #{fnn_forward.1} parent=1 // pred_check_branch
      %20 = sbr.rel (0) target = $region13
    $region12: #{fnn_forward.1} parent=1 // pred_region
      _
    $region13: #{fnn_forward.1} parent=1 // pred_fallthru
      _
    // Predicated region
    $region14: #{fnn_forward.1} parent=1 // pred_check
      _
    $region15: #{fnn_forward.1} parent=1 // pred_check_branch
      %22 = sbr.rel (0) target = $region17
    $region16: #{fnn_forward.1} parent=1 // pred_region
      _
    $region17: #{fnn_forward.1} parent=1 // pred_fallthru
      _
    // Predicated region
    $region18: #{fnn_forward.1} parent=1 // pred_check
      _
    $region19: #{fnn_forward.1} parent=1 // pred_check_branch
      %24 = sbr.rel (0) target = $region21
    $region20: #{fnn_forward.1} parent=1 // pred_region
      _
    $region21: #{fnn_forward.1} parent=1 // pred_fallthru
      _
    // Predicated region
    $region22: #{fnn_forward.1} parent=1 // pred_check
      _
    $region23: #{fnn_forward.1} parent=1 // pred_check_branch
      %26 = sbr.rel (0) target = $region25
    $region24: #{fnn_forward.1} parent=1 // pred_region
      _
    $region25: #{fnn_forward.1} parent=1 // pred_fallthru
      _
    // Predicated region
    $region26: #{fnn_forward.1} parent=1 // pred_check
      _
    $region27: #{fnn_forward.1} parent=1 // pred_check_branch
      %28 = sbr.rel (0) target = $region29
    $region28: #{fnn_forward.1} parent=1 // pred_region
      _
    $region29: #{fnn_forward.1} parent=1 // pred_fallthru
      _
    %v30 = vld [vmem:[%s0] sm:$0xff]
    %v31 = vpack.c.bf16 %v30, %v30
    %v32 = vld [vmem:[%s1] sm:$0xf]
    %v33 = vld [vmem:[%s1 + $0x4] sm:$0xf]
    %v34 = vld [vmem:[%s2] sm:$0x1]
    %v36 = vlaneseq
    %v37 = vshrl.u32 %v36, 7
    %v38 = vsub.s32 0, %v37
    %v39 = vrot.slane %v34, %v38
    %v43 = vunpack.c.l.b16 %v32
    %v44 = vunpack.c.l.b16 %v33
    %v45 = vpack.c.b16 %v44, %v43
    %vm47 = vcmask 130048
    %v49 = vsel %vm47, %v31, 0
    %51 = vmatprep.subr.bf16.mxu0 0
    %52 = vmatpush1.bf16.msra.mxu0 0
    %53 = vmatprep.subr.bf16.mxu0 0
    %54 = vmatpush1.bf16.msra.mxu0 0
    %55 = vmatprep.subr.bf16.mxu0 0
    %56 = vmatpush1.bf16.msra.mxu0 0
    %57 = vmatprep.subr.bf16.mxu0 0
    %58 = vmatpush1.bf16.msra.mxu0 0
    %59 = vmatprep.subr.bf16.mxu0 0
    %60 = vmatpush1.bf16.msra.mxu0 0
    %61 = vmatprep.subr.bf16.mxu0 0
    %62 = vmatpush1.bf16.msra.mxu0 0
    %63 = vmatprep.subr.bf16.mxu0 0
    %64 = vmatpush1.bf16.msra.mxu0 0
    %65 = vmatprep.subr.bf16.mxu0 0
    %66 = vmatpush1.bf16.msra.mxu0 %v45
    %67 = vmatprep.subr.bf16.mxu0 0
    %68 = vmatpush2.bf16.msra.mxu0 0
    %69 = vmatprep.subr.bf16.mxu0 0
    %70 = vmatpush2.bf16.msra.mxu0 0
    %71 = vmatprep.subr.bf16.mxu0 0
    %72 = vmatpush2.bf16.msra.mxu0 0
    %73 = vmatprep.subr.bf16.mxu0 0
    %74 = vmatpush2.bf16.msra.mxu0 0
    %75 = vmatprep.subr.bf16.mxu0 0
    %76 = vmatpush2.bf16.msra.mxu0 0
    %77 = vmatprep.subr.bf16.mxu0 0
    %78 = vmatpush2.bf16.msra.mxu0 0
    %79 = vmatprep.subr.bf16.mxu0 0
    %80 = vmatpush2.bf16.msra.mxu0 0
    %81 = vmatprep.subr.bf16.mxu0 0
    %82 = vmatpush2.bf16.msra.mxu0 0
    %83 = vmatprep.mubr.bf16.mxu0 0
    %84 = vmatmul.mubr.bf16.gmra.mxu0 %v49
    %v85 = vpop.f32.mrf.mxu0
    %v86 = vadd.f32 %v39, %v85
    %v87 = vpop.f32.mrf.mxu0
    %v88 = vpop.f32.mrf.mxu0
    %v89 = vpop.f32.mrf.mxu0
    %90 = vdwg.mxu0
    %v91 = vmax.f32 %v86, 0.0
    %v92 = vpack.c.bf16 %v91, %v91
    %v93 = vld [vmem:[%s3] sm:$0xf]
    %v94 = vld [vmem:[%s3 + $0x4] sm:$0xf]
    %v95 = vld [vmem:[%s3 + $0x8] sm:$0xf]
    %v96 = vld [vmem:[%s3 + $0xc] sm:$0xf]
    %v97 = vld [vmem:[%s4] sm:$0x1]
    %v99 = vlaneseq
    %v100 = vshrl.u32 %v99, 7
    %v101 = vsub.s32 0, %v100
    %v102 = vrot.slane %v97, %v101
    %v108 = vunpack.c.l.b16 %v93
    %v109 = vunpack.c.l.b16 %v94
    %v110 = vunpack.c.l.b16 %v95
    %v111 = vunpack.c.l.b16 %v96
    %v112 = vpack.c.b16 %v109, %v108
    %v113 = vpack.c.b16 %v111, %v110
    %vm116 = vcmask 261120
    %v118 = vsel %vm116, %v92, 0
    %120 = vmatprep.subr.bf16.mxu0 0
    %121 = vmatpush1.bf16.msra.mxu0 0
    %122 = vmatprep.subr.bf16.mxu0 0
    %123 = vmatpush1.bf16.msra.mxu0 0
    %124 = vmatprep.subr.bf16.mxu0 0
    %125 = vmatpush1.bf16.msra.mxu0 0
    %126 = vmatprep.subr.bf16.mxu0 0
    %127 = vmatpush1.bf16.msra.mxu0 0
    %128 = vmatprep.subr.bf16.mxu0 0
    %129 = vmatpush1.bf16.msra.mxu0 0
    %130 = vmatprep.subr.bf16.mxu0 0
    %131 = vmatpush1.bf16.msra.mxu0 0
    %132 = vmatprep.subr.bf16.mxu0 0
    %133 = vmatpush1.bf16.msra.mxu0 %v113
    %134 = vmatprep.subr.bf16.mxu0 0
    %135 = vmatpush1.bf16.msra.mxu0 %v112
    %136 = vmatprep.subr.bf16.mxu0 0
    %137 = vmatpush2.bf16.msra.mxu0 0
    %138 = vmatprep.subr.bf16.mxu0 0
    %139 = vmatpush2.bf16.msra.mxu0 0
    %140 = vmatprep.subr.bf16.mxu0 0
    %141 = vmatpush2.bf16.msra.mxu0 0
    %142 = vmatprep.subr.bf16.mxu0 0
    %143 = vmatpush2.bf16.msra.mxu0 0
    %144 = vmatprep.subr.bf16.mxu0 0
    %145 = vmatpush2.bf16.msra.mxu0 0
    %146 = vmatprep.subr.bf16.mxu0 0
    %147 = vmatpush2.bf16.msra.mxu0 0
    %148 = vmatprep.subr.bf16.mxu0 0
    %149 = vmatpush2.bf16.msra.mxu0 0
    %150 = vmatprep.subr.bf16.mxu0 0
    %151 = vmatpush2.bf16.msra.mxu0 0
    %152 = vmatprep.mubr.bf16.mxu0 0
    %153 = vmatmul.mubr.bf16.gmra.mxu0 %v118
    %v154 = vpop.f32.mrf.mxu0
    %v155 = vadd.f32 %v102, %v154
    %v156 = vpop.f32.mrf.mxu0
    %v157 = vpop.f32.mrf.mxu0
    %v158 = vpop.f32.mrf.mxu0
    %159 = vdwg.mxu0
    %v160 = vmax.f32 %v155, 0.0
    %v161 = vld [vmem:[%s5] sm:$0x1]
    %v162 = vld [vmem:[#allocation2] sm:$0x1]
    %164 = vset.pattern.permute.xlu0 0
    %165 = vperm.xlu0 %164, %v162
    %v166 = vpop.permute.xlu0 %165
    %v168 = vlaneseq
    %v169 = vshrl.u32 %v168, 7
    %v170 = vsub.s32 0, %v169
    %v171 = vrot.slane %v166, %v170
    %v173 = vsel %vm116, %v161, 0
    %v176 = vsel %vm116, %v160, 0
    %178 = vmatprep.subr.mxu0 0.0
    %179 = vmatpush1.xpose.msra.mxu0 0.0
    %180 = vmatprep.subr.mxu0 0.0
    %181 = vmatpush1.xpose.msra.mxu0 0.0
    %182 = vmatprep.subr.mxu0 0.0
    %183 = vmatpush1.xpose.msra.mxu0 0.0
    %184 = vmatprep.subr.mxu0 0.0
    %185 = vmatpush1.xpose.msra.mxu0 0.0
    %186 = vmatprep.subr.mxu0 0.0
    %187 = vmatpush1.xpose.msra.mxu0 0.0
    %188 = vmatprep.subr.mxu0 0.0
    %189 = vmatpush1.xpose.msra.mxu0 0.0
    %190 = vmatprep.subr.mxu0 0.0
    %191 = vmatpush1.xpose.msra.mxu0 0.0
    %192 = vmatprep.subr.mxu0 0.0
    %193 = vmatpush1.xpose.msra.mxu0 0.0
    %194 = vmatprep.subr.mxu0 0.0
    %195 = vmatpush1.xpose.msra.mxu0 0.0
    %196 = vmatprep.subr.mxu0 0.0
    %197 = vmatpush1.xpose.msra.mxu0 0.0
    %198 = vmatprep.subr.mxu0 0.0
    %199 = vmatpush1.xpose.msra.mxu0 0.0
    %200 = vmatprep.subr.mxu0 0.0
    %201 = vmatpush1.xpose.msra.mxu0 0.0
    %202 = vmatprep.subr.mxu0 0.0
    %203 = vmatpush1.xpose.msra.mxu0 0.0
    %204 = vmatprep.subr.mxu0 0.0
    %205 = vmatpush1.xpose.msra.mxu0 0.0
    %206 = vmatprep.subr.mxu0 0.0
    %207 = vmatpush1.xpose.msra.mxu0 0.0
    %208 = vmatprep.subr.mxu0 0.0
    %209 = vmatpush1.xpose.msra.mxu0 %v176
    %210 = vmatprep.subr.mxu0 0.0
    %211 = vmatpush2.xpose.msra.mxu0 0.0
    %212 = vmatprep.subr.mxu0 0.0
    %213 = vmatpush2.xpose.msra.mxu0 0.0
    %214 = vmatprep.subr.mxu0 0.0
    %215 = vmatpush2.xpose.msra.mxu0 0.0
    %216 = vmatprep.subr.mxu0 0.0
    %217 = vmatpush2.xpose.msra.mxu0 0.0
    %218 = vmatprep.subr.mxu0 0.0
    %219 = vmatpush2.xpose.msra.mxu0 0.0
    %220 = vmatprep.subr.mxu0 0.0
    %221 = vmatpush2.xpose.msra.mxu0 0.0
    %222 = vmatprep.subr.mxu0 0.0
    %223 = vmatpush2.xpose.msra.mxu0 0.0
    %224 = vmatprep.subr.mxu0 0.0
    %225 = vmatpush2.xpose.msra.mxu0 0.0
    %226 = vmatprep.subr.mxu0 0.0
    %227 = vmatpush2.xpose.msra.mxu0 0.0
    %228 = vmatprep.subr.mxu0 0.0
    %229 = vmatpush2.xpose.msra.mxu0 0.0
    %230 = vmatprep.subr.mxu0 0.0
    %231 = vmatpush2.xpose.msra.mxu0 0.0
    %232 = vmatprep.subr.mxu0 0.0
    %233 = vmatpush2.xpose.msra.mxu0 0.0
    %234 = vmatprep.subr.mxu0 0.0
    %235 = vmatpush2.xpose.msra.mxu0 0.0
    %236 = vmatprep.subr.mxu0 0.0
    %237 = vmatpush2.xpose.msra.mxu0 0.0
    %238 = vmatprep.subr.mxu0 0.0
    %239 = vmatpush2.xpose.msra.mxu0 0.0
    %240 = vmatprep.subr.mxu0 0.0
    %241 = vmatpush2.xpose.msra.mxu0 0.0
    %242 = vmatprep.mubr.f32.mxu0 0.0
    %243 = vmatmul.mubr.f32.gmra.mxu0 %v173
    %v244 = vpop.f32.mrf.mxu0
    %v245 = vadd.f32 %v171, %v244
    %v246 = vpop.f32.mrf.mxu0
    %247 = vdwg.mxu0
    %vm248 = vcmask 57344
    %249 = vst.msk [vmem:[#allocation3] sm:$0x1] %vm248, %v245
    // Predicated region
    $region30: #{fnn_forward.1} parent=1 // pred_check
      _
    $region31: #{fnn_forward.1} parent=1 // pred_check_branch
      %251 = sbr.rel (0) target = $region33
    $region32: #{fnn_forward.1} parent=1 // pred_region
      %s253 = ssub.s32 16, 16
      %254 = vsyncadd [#allocation4], %s253
      %s256 = sshll.u32 [#allocation3], 4
      %s257 = int_to_ptr.vmem [resolvable:$true] %s256
      %259 = dma.vmem_to_hbm [thread:$0]  %s257, 16, %s7, [#allocation4]
    $region33: #{fnn_forward.1} parent=1 // pred_fallthru
      _
    // Predicated region
    $region34: #{fnn_forward.1} parent=1 // pred_check
      _
    $region35: #{fnn_forward.1} parent=1 // pred_check_branch
      %261 = sbr.rel (0) target = $region37
    $region36: #{fnn_forward.1} parent=1 // pred_region
      %262 = dma.done [#allocation4], 16
    $region37: #{fnn_forward.1} parent=1 // pred_fallthru
      _
    %263 = vsyncpa [#allocation4], 1

</llo_original>
